<compile_context>
chip_gen: v5e
topology: v5e:2x2
jax: 0.10.0
libtpu: 0.0.40
codegen_flags: <defaults>
</compile_context>

<pallas_src>
import math

import jax
import jax.numpy as jnp
from jax.experimental import pallas as pl
from jax.experimental.pallas import tpu as pltpu


def _round_up(x, m):
    return (x + m - 1) // m * m


def _logreg_kernel(x_ref, wt_ref, b_ref, o_ref):
    # x_ref : (tn, ft_in)          -- current seq tile (streamed)
    # wt_ref: (ft_in, nb_classes)  -- resident, already transposed in wrapper
    # b_ref : (1, nb_classes)      -- resident
    # o_ref : (tn, nb_classes)     -- output tile
    acc = jnp.dot(x_ref[...], wt_ref[...], preferred_element_type=jnp.float32)
    o_ref[...] = (acc + b_ref[...]).astype(o_ref.dtype)


def _choose_tile(n, ft_in, nb_classes, *, buf_budget=24 * 1024 * 1024):
    """Pick the seq tile height (rows)."""
    # VMEM lane dim pads to 128: a (tn, 32) f32 tile really costs tn*128*4 bytes.
    padded_ft = _round_up(max(ft_in, 128), 128)
    padded_nb = _round_up(max(nb_classes, 128), 128)
    # Double-buffered seq + output VMEM bytes per row (f32).
    per_row = 2 * (padded_ft + padded_nb) * 4
    tn = (buf_budget // per_row) // 512 * 512
    tn = max(tn, 512)
    # Keep >= ~4 grid steps so v7x's two TensorCores both get work
    # (harmless on single-TC v5e/v6e).
    tn = min(tn, _round_up(pl.cdiv(n, 4), 512))
    if n <= tn:
        return n  # full-array block (always legal, regardless of 8/128 alignment)
    return tn


def _vmem_limit(tn, ft_in, nb_classes):
    padded_ft = _round_up(max(ft_in, 128), 128)
    padded_nb = _round_up(max(nb_classes, 128), 128)
    seq_buf = 2 * tn * padded_ft * 4
    out_buf = 2 * tn * padded_nb * 4
    w_buf = 2 * _round_up(max(ft_in, 8), 8) * padded_nb * 4
    b_buf = 2 * 8 * padded_nb * 4
    total = seq_buf + out_buf + w_buf + b_buf + (4 << 20)  # + headroom
    # Clamp to a v7x-safe ceiling (64 MiB physical VMEM there).
    return int(min(max(total, 16 << 20), 48 << 20))


def logreg_forward(seq, weight, bias, *, force_pallas=False):
    """seq: (N, ft_in) f32; weight: (nb_classes, ft_in) f32; bias: (nb_classes,) f32.
    Returns (N, nb_classes) = seq @ weight.T + bias."""
    n, ft_in = seq.shape
    nb_classes = weight.shape[0]

    # Small-problem fallback: launch + grid machinery would dominate.
    if not force_pallas and n * ft_in * 4 < 256 * 1024:
        return seq @ weight.T + bias

    tn = _choose_tile(n, ft_in, nb_classes)
    grid = (pl.cdiv(n, tn),)

    w_t = weight.T                      # one tiny (ft_in, nb_classes) transpose
    b2d = bias.reshape(1, nb_classes)   # 2D for VMEM, broadcast along sublanes

    cost = pl.CostEstimate(
        flops=2 * n * ft_in * nb_classes,
        transcendentals=0,
        bytes_accessed=4 * (n * ft_in + ft_in * nb_classes + n * nb_classes),
    )

    return pl.pallas_call(
        _logreg_kernel,
        out_shape=jax.ShapeDtypeStruct((n, nb_classes), seq.dtype),
        grid_spec=pltpu.PrefetchScalarGridSpec(
            num_scalar_prefetch=0,
            grid=grid,
            in_specs=[
                pl.BlockSpec((tn, ft_in), lambda i: (i, 0)),            # seq tile
                pl.BlockSpec((ft_in, nb_classes), lambda i: (0, 0)),    # W.T, resident
                pl.BlockSpec((1, nb_classes), lambda i: (0, 0)),        # bias, resident
            ],
            out_specs=pl.BlockSpec((tn, nb_classes), lambda i: (i, 0)),
        ),
        compiler_params=pltpu.CompilerParams(
            dimension_semantics=("parallel",),   # megacore split on v7x
            vmem_limit_bytes=_vmem_limit(tn, ft_in, nb_classes),
        ),
        cost_estimate=cost,
    )(seq, w_t, b2d)


def init_logreg_params(key, ft_in, nb_classes):
    """Xavier-uniform weight (torch.nn.init.xavier_uniform_), zero bias —
    matches LogReg.weights_init."""
    limit = math.sqrt(6.0 / (ft_in + nb_classes))
    weight = jax.random.uniform(
        key, (nb_classes, ft_in), dtype=jnp.float32, minval=-limit, maxval=limit)
    bias = jnp.zeros((nb_classes,), dtype=jnp.float32)
    return weight, bias


if __name__ == "__main__":
    # Small shapes consistent with the module: batch(seq len)=8, ft_in=32, nb_classes=8.
    N, FT_IN, NB_CLASSES = 8, 32, 8

    key = jax.random.PRNGKey(0)
    k_w, k_x, k_x2 = jax.random.split(key, 3)

    weight, bias = init_logreg_params(k_w, FT_IN, NB_CLASSES)
    seq = jax.random.normal(k_x, (N, FT_IN), dtype=jnp.float32)

    # force_pallas so the kernel itself (single full-array block) is exercised.
    out = logreg_forward(seq, weight, bias, force_pallas=True)
    jax.block_until_ready(out)
    ref = seq @ weight.T + bias
    assert out.shape == (N, NB_CLASSES)
    assert jnp.allclose(out, ref, atol=1e-5, rtol=1e-5)

    # Larger case: multiple grid steps + a partial final tile (masked writeback).
    N2 = 13000
    seq2 = jax.random.normal(k_x2, (N2, FT_IN), dtype=jnp.float32)
    out2 = logreg_forward(seq2, weight, bias)
    jax.block_until_ready(out2)
    ref2 = seq2 @ weight.T + bias
    assert out2.shape == (N2, NB_CLASSES)
    assert jnp.allclose(out2, ref2, atol=1e-4, rtol=1e-5)

    print("KERNEL_OK")
</pallas_src>

<mosaic_0001>
module attributes {stable_mosaic.version = 11 : i64} {
  func.func @_logreg_kernel(%arg0: i32, %arg1: memref<8x32xf32, #tpu.memory_space<vmem>>, %arg2: memref<32x8xf32, #tpu.memory_space<vmem>>, %arg3: memref<1x8xf32, #tpu.memory_space<vmem>>, %arg4: memref<8x8xf32, #tpu.memory_space<vmem>>) attributes {dimension_semantics = [#tpu.dimension_semantics<parallel>], iteration_bounds = array<i64: 1>, scalar_prefetch = 0 : i64, scratch_operands = 0 : i64, tpu.core_type = #tpu.core_type<tc>, window_params = [{transform_indices = @transform_0, window_bounds = array<i64: 8, 32>}, {pipeline_mode = #tpu.pipeline_mode<synchronous>, transform_indices = @transform_1, window_bounds = array<i64: 32, 8>}, {pipeline_mode = #tpu.pipeline_mode<synchronous>, transform_indices = @transform_2, window_bounds = array<i64: 1, 8>}, {transform_indices = @transform_3, window_bounds = array<i64: 8, 8>}]} {
    %c0 = arith.constant 0 : index
    %c0_0 = arith.constant 0 : index
    %0 = vector.load %arg1[%c0, %c0_0] : memref<8x32xf32, #tpu.memory_space<vmem>>, vector<8x32xf32>
    %c0_1 = arith.constant 0 : index
    %c0_2 = arith.constant 0 : index
    %1 = vector.load %arg2[%c0_1, %c0_2] : memref<32x8xf32, #tpu.memory_space<vmem>>, vector<32x8xf32>
    %cst = arith.constant dense<0.000000e+00> : vector<8x8xf32>
    %2 = tpu.matmul %0, %1, %cst {dimension_numbers = #tpu.dot_dimension_numbers<[1], [0], [0], [1], [0, 0, 1, 1], [], []>} : vector<8x32xf32>, vector<32x8xf32>, vector<8x8xf32> -> vector<8x8xf32>
    %c0_3 = arith.constant 0 : index
    %c0_4 = arith.constant 0 : index
    %3 = vector.load %arg3[%c0_3, %c0_4] : memref<1x8xf32, #tpu.memory_space<vmem>>, vector<1x8xf32>
    %4 = vector.broadcast %3 : vector<1x8xf32> to vector<8x8xf32>
    %5 = arith.addf %2, %4 : vector<8x8xf32>
    %c0_5 = arith.constant 0 : index
    %c0_6 = arith.constant 0 : index
    %6 = vector.load %arg4[%c0_5, %c0_6] : memref<8x8xf32, #tpu.memory_space<vmem>>, vector<8x8xf32>
    tpu.vector_store %arg4[%c0_5, %c0_6], %5 {strides = array<i32>} : memref<8x8xf32, #tpu.memory_space<vmem>>, vector<8x8xf32>,
    return
  }
  func.func @transform_0(%arg0: i32) -> (i32, i32) {
    %c0_i32 = arith.constant 0 : i32
    %c0_i32_0 = arith.constant 0 : i32
    return %arg0, %c0_i32 : i32, i32
  }
  func.func @transform_1(%arg0: i32) -> (i32, i32) {
    %c0_i32 = arith.constant 0 : i32
    %c0_i32_0 = arith.constant 0 : i32
    %c0_i32_1 = arith.constant 0 : i32
    return %c0_i32, %c0_i32_0 : i32, i32
  }
  func.func @transform_2(%arg0: i32) -> (i32, i32) {
    %c0_i32 = arith.constant 0 : i32
    %c0_i32_0 = arith.constant 0 : i32
    %c0_i32_1 = arith.constant 0 : i32
    return %c0_i32, %c0_i32_0 : i32, i32
  }
  func.func @transform_3(%arg0: i32) -> (i32, i32) {
    %c0_i32 = arith.constant 0 : i32
    %c0_i32_0 = arith.constant 0 : i32
    return %arg0, %c0_i32 : i32, i32
  }
}

</mosaic_0001>

<llo_original>
// kernel: tpu_custom_call.1
$region0: #{tpu_custom_call.1}
  #allocation0 [shape = 'u32[]', space=smem, size = 0x4, offset = 0x4, fixed_abs, tag = 'smem constant byte address 0x4 - core index']
  #allocation1 [shape = 'u32[72,128]{1,0:T(1,128)}', space=vmem, size = 0x9000, scoped, tag = 'internal scratch']
  %s0 = inlined_call_operand.vmem [shape: f32[8,32], index: 0, kind: input, shape index: {}]
  %s1 = inlined_call_operand.vmem [shape: f32[32,8], index: 1, kind: input, shape index: {}]
  %s2 = inlined_call_operand.vmem [shape: f32[1,8], index: 2, kind: input, shape index: {}]
  %s3 = inlined_call_operand.hbm [shape: f32[8,8], index: 3, kind: output, shape index: {}]
  %s4 = sld [smem:[#allocation0]]
  $region22: #{tpu_custom_call.1} parent=0
    _
  %s6 = ssub.s32 1, %s4
  %s7 = scalar_select 0, %s6, %s4
  $region1: #{tpu_custom_call.1} parent=0
    #allocation2 [shape = 'u8[4096]{0}', space=vmem, size = 0x1000, scoped, tag = 'output window, operand 0, single buffered']
    #allocation3 [shape = 's32[1]{0}', space=sflag, size = 0x4, scoped, tag = 'scoped memory for tpu_custom_call.1']
    %8 = vsyncpa [#allocation3], 0
    // Predicated region
    $region2: #{tpu_custom_call.1} parent=1 // pred_check
      _
    $region3: #{tpu_custom_call.1} parent=1 // pred_check_branch
      %10 = sbr.rel (0) target = $region5
    $region4: #{tpu_custom_call.1} parent=1 // pred_region
      _
    $region5: #{tpu_custom_call.1} parent=1 // pred_fallthru
      _
    // Predicated region
    $region6: #{tpu_custom_call.1} parent=1 // pred_check
      _
    $region7: #{tpu_custom_call.1} parent=1 // pred_check_branch
      %12 = sbr.rel (0) target = $region9
    $region8: #{tpu_custom_call.1} parent=1 // pred_region
      _
    $region9: #{tpu_custom_call.1} parent=1 // pred_fallthru
      _
    // Predicated region
    $region10: #{tpu_custom_call.1} parent=1 // pred_check
      _
    $region11: #{tpu_custom_call.1} parent=1 // pred_check_branch
      %14 = sbr.rel (0) target = $region13
    $region12: #{tpu_custom_call.1} parent=1 // pred_region
      _
    $region13: #{tpu_custom_call.1} parent=1 // pred_fallthru
      _
    %v15 = vld [vmem:[%s0] sm:$0xff]
    %v16 = vld [vmem:[%s1] sm:$0xff]
    %v17 = vld [vmem:[%s1 + $0x8] sm:$0xff]
    %v18 = vld [vmem:[%s1 + $0x10] sm:$0xff]
    %v19 = vld [vmem:[%s1 + $0x18] sm:$0xff]
    %v20 = vld [vmem:[%s2] sm:$0x1]
    %v22 = vperm.slane %v20, 0
    %vm24 = vcmask 261120
    %v26 = vsel %vm24, %v15, 0
    %28 = vmatpush.msra.mxu0 0.0
    %29 = vmatpush.msra.mxu0 0.0
    %30 = vmatpush.msra.mxu0 0.0
    %31 = vmatpush.msra.mxu0 0.0
    %32 = vmatpush.msra.mxu0 0.0
    %33 = vmatpush.msra.mxu0 0.0
    %34 = vmatpush.msra.mxu0 0.0
    %35 = vmatpush.msra.mxu0 0.0
    %36 = vmatpush.msra.mxu0 0.0
    %37 = vmatpush.msra.mxu0 0.0
    %38 = vmatpush.msra.mxu0 0.0
    %39 = vmatpush.msra.mxu0 0.0
    %40 = vmatpush.msra.mxu0 %v19
    %41 = vmatpush.msra.mxu0 %v18
    %42 = vmatpush.msra.mxu0 %v17
    %43 = vmatpush.msra.mxu0 %v16
    %44 = vmatmul.f32.gmra.mxu0 %v26
    %v45 = vpop.f32.mrf.mxu0
    %v46 = vadd.f32 %v22, %v45
    %47 = vdwg.mxu0
    %vm48 = vcmask 64512
    %49 = vst.msk [vmem:[#allocation2] sm:$0xff] %vm48, %v46
    // Predicated region
    $region14: #{tpu_custom_call.1} parent=1 // pred_check
      _
    $region15: #{tpu_custom_call.1} parent=1 // pred_check_branch
      %51 = sbr.rel (0) target = $region17
    $region16: #{tpu_custom_call.1} parent=1 // pred_region
      %53 = vsyncadd [#allocation3], 0
      %s55 = sshll.u32 [#allocation2], 4
      %s56 = int_to_ptr.vmem [resolvable:$true] %s55
      %s57 = sshll.u32 %s3, 4
      %s58 = int_to_ptr.hbm [resolvable:$true] %s57
      %60 = dma.vmem_to_hbm [thread:$0]  %s56, 128, %s58, [#allocation3]
    $region17: #{tpu_custom_call.1} parent=1 // pred_fallthru
      _
    // Predicated region
    $region18: #{tpu_custom_call.1} parent=1 // pred_check
      _
    $region19: #{tpu_custom_call.1} parent=1 // pred_check_branch
      %62 = sbr.rel (0) target = $region21
    $region20: #{tpu_custom_call.1} parent=1 // pred_region
      %64 = dma.done [#allocation3], 128
    $region21: #{tpu_custom_call.1} parent=1 // pred_fallthru
      _
    %65 = vsyncpa [#allocation3], 1

</llo_original>
